<compile_context>
chip_gen: v7x
topology: tpu7x:2x2x1
jax: 0.10.0
libtpu: 0.0.40
codegen_flags: <defaults>
</compile_context>

<pallas_src>
import functools

import jax
import jax.numpy as jnp
from jax.experimental import pallas as pl
from jax.experimental.pallas import tpu as pltpu


def _uprr_kernel(yp_ref, lab_ref, theta_t_ref, th_pinv_ref, out_ref,
                 ce_acc, corr_acc, cnt_acc,
                 *, num_bags, gradient_ascent, combination):
    step = pl.program_id(0)

    @pl.when(step == 0)
    def _init():
        ce_acc[...] = jnp.zeros_like(ce_acc)
        corr_acc[...] = jnp.zeros_like(corr_acc)
        cnt_acc[...] = jnp.zeros_like(cnt_acc)

    yp = yp_ref[...].astype(jnp.float32)        # (C, TILE_N): classes x samples (samples on lanes)
    lab = lab_ref[...]                          # (1, TILE_N): int32 bag labels (== num_bags for padding)
    num_classes = yp.shape[0]

    # --- per-sample log-sum-exp (class axis = sublanes) and cross-entropy table ---
    mx = jnp.max(yp, axis=0, keepdims=True)                                # (1, TILE_N)
    lse = mx + jnp.log(jnp.sum(jnp.exp(yp - mx), axis=0, keepdims=True))   # (1, TILE_N)
    ce = lse - yp                                                          # (C, TILE_N)

    # --- first-argmax one-hot (torch.max tie-break: first maximal class) ---
    cls = jax.lax.broadcasted_iota(jnp.int32, yp.shape, 0).astype(jnp.float32)
    first_idx = jnp.min(jnp.where(yp == mx, cls, float(num_classes)),
                        axis=0, keepdims=True)                             # (1, TILE_N)
    is_max = (cls == first_idx).astype(jnp.float32)                        # (C, TILE_N)

    # --- masked per-bag reductions over the sample (lane) axis -> (C,B)/(1,B) ---
    lane_bag = jax.lax.broadcasted_iota(jnp.int32, (1, num_bags), 1)       # (1, B)
    ce_upd = jnp.zeros(ce_acc.shape, jnp.float32)
    corr_upd = jnp.zeros(corr_acc.shape, jnp.float32)
    cnt_upd = jnp.zeros(cnt_acc.shape, jnp.float32)
    for bag in range(num_bags):                                            # B small, unrolled
        m = (lab == bag).astype(jnp.float32)                               # (1, TILE_N)
        sel = lane_bag == bag                                              # (1, B)
        ce_upd = ce_upd + jnp.where(sel, jnp.sum(ce * m, axis=1, keepdims=True), 0.0)
        corr_upd = corr_upd + jnp.where(sel, jnp.sum(is_max * m, axis=1, keepdims=True), 0.0)
        cnt_upd = cnt_upd + jnp.where(sel, jnp.sum(m, axis=1, keepdims=True), 0.0)
    ce_acc[...] += ce_upd
    corr_acc[...] += corr_upd
    cnt_acc[...] += cnt_upd

    # --- theta / theta^+ weighting + final reduction (only once all tiles are in) ---
    @pl.when(step == pl.num_programs(0) - 1)
    def _finalize():
        theta_t = theta_t_ref[...].astype(jnp.float32)         # (C, B) == theta.T
        th_pinv = th_pinv_ref[...].astype(jnp.float32)         # (C, B) == pinverse(theta)
        count = cnt_acc[...]                                   # (1, B)
        nonempty = count > 0.0
        safe = jnp.where(nonempty, count, 1.0)
        output = ce_acc[...] / safe        # mean CE per (class, bag) == nn.CrossEntropyLoss
        partial = (count - corr_acc[...]) / safe               # 0-1 partial risk
        one_minus_theta = 1.0 - theta_t
        diff = output - one_minus_theta
        flt = jnp.where(partial < one_minus_theta,
                        -gradient_ascent * diff, diff) * jnp.abs(th_pinv)
        bag_risk = output * th_pinv
        per_bag = ((1.0 - combination) * jnp.sum(bag_risk, axis=0, keepdims=True)
                   + combination * jnp.sum(flt, axis=0, keepdims=True))    # (1, B)
        # empty bags keep their torch.ones() init (the PyTorch `continue` branch)
        per_bag = jnp.where(nonempty, per_bag, 1.0)
        out_ref[...] = jnp.reshape(jnp.sum(per_bag), (1, 1))


def u_prr_forward(y_true, y_pred, theta, gradient_ascent, combination,
                  *, max_tile_n=32768):
    """JAX/Pallas equivalent of U_PRR.forward(y_true, y_pred)."""
    n, c = y_pred.shape
    b = theta.shape[0]

    theta32 = theta.astype(jnp.float32)
    theta_t = theta32.T                                  # (C, B)
    theta_pinv = jnp.linalg.pinv(theta32)                # (C, B), pinverse glue outside kernel

    # lane-dense layout: class axis on sublanes, sample axis on the 128-wide lanes.
    y_pred_t = y_pred.T                                  # (C, N), keep caller dtype (bf16 ok)
    labels = y_true.astype(jnp.int32)                    # (N,)

    # choose a big N tile (block ~0.5 MiB at 32K samples) and pad N to a multiple of it
    tile_n = int(min(max_tile_n, ((n + 127) // 128) * 128))
    tile_n = ((tile_n + 127) // 128) * 128
    grid_n = (n + tile_n - 1) // tile_n
    n_pad = grid_n * tile_n
    if n_pad != n:
        y_pred_t = jnp.pad(y_pred_t, ((0, 0), (0, n_pad - n)))
        labels = jnp.pad(labels, (0, n_pad - n), constant_values=b)  # b == invalid bag -> masked out
    labels = labels.reshape(1, n_pad)

    kernel = functools.partial(_uprr_kernel,
                               num_bags=int(b),
                               gradient_ascent=float(gradient_ascent),
                               combination=float(combination))

    bytes_accessed = int(y_pred_t.size * y_pred_t.dtype.itemsize
                         + labels.size * 4 + 2 * b * c * 4 + 4)
    cost = pl.CostEstimate(flops=int(12 * n_pad * c),
                           transcendentals=int(n_pad * (c + 1)),
                           bytes_accessed=bytes_accessed)

    out = pl.pallas_call(
        kernel,
        out_shape=jax.ShapeDtypeStruct((1, 1), jnp.float32),
        grid_spec=pltpu.PrefetchScalarGridSpec(
            num_scalar_prefetch=0,
            grid=(grid_n,),
            in_specs=[
                pl.BlockSpec((c, tile_n), lambda i: (0, i)),   # y_pred^T tile
                pl.BlockSpec((1, tile_n), lambda i: (0, i)),   # labels tile
                pl.BlockSpec((c, b), lambda i: (0, 0)),        # theta^T (resident)
                pl.BlockSpec((c, b), lambda i: (0, 0)),        # pinv(theta) (resident)
            ],
            out_specs=pl.BlockSpec((1, 1), lambda i: (0, 0)),
            scratch_shapes=[
                pltpu.VMEM((c, b), jnp.float32),   # ce_sum accumulator
                pltpu.VMEM((c, b), jnp.float32),   # correct-count accumulator
                pltpu.VMEM((1, b), jnp.float32),   # per-bag sample count
            ]),
        compiler_params=pltpu.CompilerParams(
            dimension_semantics=("arbitrary",),
            vmem_limit_bytes=32 * 1024 * 1024),
        cost_estimate=cost,
    )(y_pred_t, labels, theta_t, theta_pinv)
    return out[0, 0]


def _reference(y_true, y_pred, theta, gradient_ascent, combination):
    """Pure-JAX transcription of the PyTorch loops, for verification."""
    b, c = theta.shape
    th_pinv = jnp.linalg.pinv(theta)                                      # (C, B)
    lse = jax.scipy.special.logsumexp(y_pred, axis=1)
    ce = lse[:, None] - y_pred                                            # (N, C)
    argmax = jnp.argmax(y_pred, axis=1)
    risk = 0.0
    for i in range(b):
        mask = (y_true == i)
        cnt = float(jnp.sum(mask))
        if cnt == 0:
            risk += 1.0
            continue
        out_j = jnp.sum(ce * mask[:, None], axis=0) / cnt                 # (C,)
        correct = jnp.array([float(jnp.sum((argmax == j) & mask)) for j in range(c)])
        partial = (cnt - correct) / cnt
        bag_risk = out_j * th_pinv[:, i]
        diff = out_j - (1.0 - theta[i])
        flt = jnp.where(partial < 1.0 - theta[i],
                        -gradient_ascent * diff, diff) * jnp.abs(th_pinv[:, i])
        risk += (1.0 - combination) * float(jnp.sum(bag_risk)) \
              + combination * float(jnp.sum(flt))
    return risk


if __name__ == "__main__":
    CLASS_NUMBER, BAG_NUMBER = 4, 3
    GRADIENT_ASCENT, COMBINATION = 1.0, 0.3

    key = jax.random.PRNGKey(0)
    k1, k2, k3 = jax.random.split(key, 3)

    # deterministic theta parameter, shape (Bag_Number, Class_Number)
    theta = (0.1 * jnp.ones((BAG_NUMBER, CLASS_NUMBER), jnp.float32)
             + 0.6 * jnp.eye(BAG_NUMBER, CLASS_NUMBER, dtype=jnp.float32))

    # multi-tile case: N=400 samples streamed through 4 grid steps of 128
    N = 400
    y_pred = jax.random.normal(k1, (N, CLASS_NUMBER), dtype=jnp.float32)
    y_true = jax.random.randint(k2, (N,), 0, BAG_NUMBER, dtype=jnp.int32)
    risk = u_prr_forward(y_true, y_pred, theta, GRADIENT_ASCENT, COMBINATION,
                         max_tile_n=128)
    risk = jax.block_until_ready(risk)
    ref = _reference(y_true, y_pred, theta, GRADIENT_ASCENT, COMBINATION)
    assert abs(float(risk) - float(ref)) < 1e-3 * max(1.0, abs(float(ref))), \
        (float(risk), float(ref))

    # small single-tile case that exercises an empty bag (labels only in {0,1})
    N2 = 16
    y_pred2 = jax.random.normal(k3, (N2, CLASS_NUMBER), dtype=jnp.float32)
    y_true2 = jnp.array([0, 1] * (N2 // 2), dtype=jnp.int32)
    risk2 = u_prr_forward(y_true2, y_pred2, theta, GRADIENT_ASCENT, COMBINATION)
    risk2 = jax.block_until_ready(risk2)
    ref2 = _reference(y_true2, y_pred2, theta, GRADIENT_ASCENT, COMBINATION)
    assert abs(float(risk2) - float(ref2)) < 1e-3, (float(risk2), float(ref2))

    print("KERNEL_OK")
</pallas_src>

<mosaic_0001>
module attributes {stable_mosaic.version = 11 : i64} {
  func.func @_uprr_kernel(%arg0: i32, %arg1: memref<4x128xf32, #tpu.memory_space<vmem>>, %arg2: memref<1x128xi32, #tpu.memory_space<vmem>>, %arg3: memref<4x3xf32, #tpu.memory_space<vmem>>, %arg4: memref<4x3xf32, #tpu.memory_space<vmem>>, %arg5: memref<1x1xf32, #tpu.memory_space<vmem>>, %arg6: memref<4x3xf32, #tpu.memory_space<vmem>>, %arg7: memref<4x3xf32, #tpu.memory_space<vmem>>, %arg8: memref<1x3xf32, #tpu.memory_space<vmem>>) attributes {dimension_semantics = [#tpu.dimension_semantics<arbitrary>], iteration_bounds = array<i64: 4>, scalar_prefetch = 0 : i64, scratch_operands = 3 : i64, tpu.core_type = #tpu.core_type<tc>, window_params = [{transform_indices = @transform_0, window_bounds = array<i64: 4, 128>}, {transform_indices = @transform_1, window_bounds = array<i64: 1, 128>}, {pipeline_mode = #tpu.pipeline_mode<synchronous>, transform_indices = @transform_2, window_bounds = array<i64: 4, 3>}, {pipeline_mode = #tpu.pipeline_mode<synchronous>, transform_indices = @transform_3, window_bounds = array<i64: 4, 3>}, {pipeline_mode = #tpu.pipeline_mode<synchronous>, transform_indices = @transform_4, window_bounds = array<i64: 1, 1>}]} {
    %c0_i32 = arith.constant 0 : i32
    %0 = arith.cmpi eq, %arg0, %c0_i32 : i32
    %1 = arith.extui %0 : i1 to i32
    %c0_i32_0 = arith.constant 0 : i32
    %2 = arith.cmpi ne, %1, %c0_i32_0 : i32
    scf.if %2 {
      %cst_45 = arith.constant 0.000000e+00 : f32
      %149 = vector.broadcast %cst_45 : f32 to vector<4x3xf32>
      %c0_46 = arith.constant 0 : index
      %c0_47 = arith.constant 0 : index
      %150 = vector.load %arg6[%c0_46, %c0_47] : memref<4x3xf32, #tpu.memory_space<vmem>>, vector<4x3xf32>
      tpu.vector_store %arg6[%c0_46, %c0_47], %149 {strides = array<i32>} : memref<4x3xf32, #tpu.memory_space<vmem>>, vector<4x3xf32>,
      %cst_48 = arith.constant 0.000000e+00 : f32
      %151 = vector.broadcast %cst_48 : f32 to vector<4x3xf32>
      %c0_49 = arith.constant 0 : index
      %c0_50 = arith.constant 0 : index
      %152 = vector.load %arg7[%c0_49, %c0_50] : memref<4x3xf32, #tpu.memory_space<vmem>>, vector<4x3xf32>
      tpu.vector_store %arg7[%c0_49, %c0_50], %151 {strides = array<i32>} : memref<4x3xf32, #tpu.memory_space<vmem>>, vector<4x3xf32>,
      %cst_51 = arith.constant 0.000000e+00 : f32
      %153 = vector.broadcast %cst_51 : f32 to vector<1x3xf32>
      %c0_52 = arith.constant 0 : index
      %c0_53 = arith.constant 0 : index
      %154 = vector.load %arg8[%c0_52, %c0_53] : memref<1x3xf32, #tpu.memory_space<vmem>>, vector<1x3xf32>
      tpu.vector_store %arg8[%c0_52, %c0_53], %153 {strides = array<i32>} : memref<1x3xf32, #tpu.memory_space<vmem>>, vector<1x3xf32>,
    } else {
    }
    %c0 = arith.constant 0 : index
    %c0_1 = arith.constant 0 : index
    %3 = vector.load %arg1[%c0, %c0_1] : memref<4x128xf32, #tpu.memory_space<vmem>>, vector<4x128xf32>
    %c0_2 = arith.constant 0 : index
    %c0_3 = arith.constant 0 : index
    %4 = vector.load %arg2[%c0_2, %c0_3] : memref<1x128xi32, #tpu.memory_space<vmem>>, vector<1x128xi32>
    %cst = arith.constant dense<0xFF800000> : vector<128xf32>
    %5 = vector.multi_reduction <maximumf>, %3, %cst [0] : vector<4x128xf32> to vector<128xf32>
    %6 = vector.shape_cast %5 : vector<128xf32> to vector<1x128xf32>
    %7 = vector.broadcast %6 : vector<1x128xf32> to vector<4x128xf32>
    %8 = arith.subf %3, %7 : vector<4x128xf32>
    %9 = math.exp %8 : vector<4x128xf32>
    %cst_4 = arith.constant dense<0.000000e+00> : vector<128xf32>
    %10 = vector.multi_reduction <add>, %9, %cst_4 [0] : vector<4x128xf32> to vector<128xf32>
    %11 = vector.shape_cast %10 : vector<128xf32> to vector<1x128xf32>
    %12 = math.log %11 : vector<1x128xf32>
    %13 = arith.addf %6, %12 : vector<1x128xf32>
    %14 = vector.broadcast %13 : vector<1x128xf32> to vector<4x128xf32>
    %15 = arith.subf %14, %3 : vector<4x128xf32>
    %16 = tpu.iota {dimensions = array<i32: 0>} : vector<4x128xi32>
    %17 = arith.sitofp %16 : vector<4x128xi32> to vector<4x128xf32>
    %18 = vector.broadcast %6 : vector<1x128xf32> to vector<4x128xf32>
    %19 = arith.cmpf oeq, %3, %18 : vector<4x128xf32>
    %cst_5 = arith.constant 4.000000e+00 : f32
    %20 = vector.broadcast %cst_5 : f32 to vector<4x128xf32>
    %21 = arith.select %19, %17, %20 : vector<4x128xi1>, vector<4x128xf32>
    %cst_6 = arith.constant dense<0x7F800000> : vector<128xf32>
    %22 = vector.multi_reduction <minimumf>, %21, %cst_6 [0] : vector<4x128xf32> to vector<128xf32>
    %23 = vector.shape_cast %22 : vector<128xf32> to vector<1x128xf32>
    %24 = vector.broadcast %23 : vector<1x128xf32> to vector<4x128xf32>
    %25 = arith.cmpf oeq, %17, %24 : vector<4x128xf32>
    %26 = arith.extui %25 : vector<4x128xi1> to vector<4x128xi32>
    %27 = arith.sitofp %26 : vector<4x128xi32> to vector<4x128xf32>
    %28 = tpu.iota {dimensions = array<i32: 1>} : vector<1x3xi32>
    %cst_7 = arith.constant 0.000000e+00 : f32
    %29 = vector.broadcast %cst_7 : f32 to vector<4x3xf32>
    %cst_8 = arith.constant 0.000000e+00 : f32
    %30 = vector.broadcast %cst_8 : f32 to vector<4x3xf32>
    %cst_9 = arith.constant 0.000000e+00 : f32
    %31 = vector.broadcast %cst_9 : f32 to vector<1x3xf32>
    %c0_i32_10 = arith.constant 0 : i32
    %32 = vector.broadcast %c0_i32_10 : i32 to vector<1x128xi32>
    %33 = arith.cmpi eq, %4, %32 : vector<1x128xi32>
    %34 = arith.extui %33 : vector<1x128xi1> to vector<1x128xi32>
    %35 = arith.sitofp %34 : vector<1x128xi32> to vector<1x128xf32>
    %c0_i32_11 = arith.constant 0 : i32
    %36 = vector.broadcast %c0_i32_11 : i32 to vector<1x3xi32>
    %37 = arith.cmpi eq, %28, %36 : vector<1x3xi32>
    %38 = vector.broadcast %35 : vector<1x128xf32> to vector<4x128xf32>
    %39 = arith.mulf %15, %38 : vector<4x128xf32>
    %cst_12 = arith.constant dense<0.000000e+00> : vector<4xf32>
    %40 = vector.multi_reduction <add>, %39, %cst_12 [1] : vector<4x128xf32> to vector<4xf32>
    %41 = vector.shape_cast %40 : vector<4xf32> to vector<4x1xf32>
    %cst_13 = arith.constant 0.000000e+00 : f32
    %42 = vector.shape_cast %37 : vector<1x3xi1> to vector<1x3xi1>
    %43 = vector.broadcast %42 : vector<1x3xi1> to vector<4x3xi1>
    %44 = vector.shape_cast %41 : vector<4x1xf32> to vector<4x1xf32>
    %45 = vector.broadcast %44 : vector<4x1xf32> to vector<4x3xf32>
    %46 = vector.broadcast %cst_13 : f32 to vector<4x3xf32>
    %47 = arith.select %43, %45, %46 : vector<4x3xi1>, vector<4x3xf32>
    %48 = arith.addf %29, %47 : vector<4x3xf32>
    %49 = vector.broadcast %35 : vector<1x128xf32> to vector<4x128xf32>
    %50 = arith.mulf %27, %49 : vector<4x128xf32>
    %cst_14 = arith.constant dense<0.000000e+00> : vector<4xf32>
    %51 = vector.multi_reduction <add>, %50, %cst_14 [1] : vector<4x128xf32> to vector<4xf32>
    %52 = vector.shape_cast %51 : vector<4xf32> to vector<4x1xf32>
    %cst_15 = arith.constant 0.000000e+00 : f32
    %53 = vector.shape_cast %37 : vector<1x3xi1> to vector<1x3xi1>
    %54 = vector.broadcast %53 : vector<1x3xi1> to vector<4x3xi1>
    %55 = vector.shape_cast %52 : vector<4x1xf32> to vector<4x1xf32>
    %56 = vector.broadcast %55 : vector<4x1xf32> to vector<4x3xf32>
    %57 = vector.broadcast %cst_15 : f32 to vector<4x3xf32>
    %58 = arith.select %54, %56, %57 : vector<4x3xi1>, vector<4x3xf32>
    %59 = arith.addf %30, %58 : vector<4x3xf32>
    %cst_16 = arith.constant dense<0.000000e+00> : vector<1xf32>
    %60 = vector.multi_reduction <add>, %35, %cst_16 [1] : vector<1x128xf32> to vector<1xf32>
    %61 = vector.shape_cast %60 : vector<1xf32> to vector<1x1xf32>
    %cst_17 = arith.constant 0.000000e+00 : f32
    %62 = vector.shape_cast %61 : vector<1x1xf32> to vector<1x1xf32>
    %63 = vector.broadcast %62 : vector<1x1xf32> to vector<1x3xf32>
    %64 = vector.broadcast %cst_17 : f32 to vector<1x3xf32>
    %65 = arith.select %37, %63, %64 : vector<1x3xi1>, vector<1x3xf32>
    %66 = arith.addf %31, %65 : vector<1x3xf32>
    %c1_i32 = arith.constant 1 : i32
    %67 = vector.broadcast %c1_i32 : i32 to vector<1x128xi32>
    %68 = arith.cmpi eq, %4, %67 : vector<1x128xi32>
    %69 = arith.extui %68 : vector<1x128xi1> to vector<1x128xi32>
    %70 = arith.sitofp %69 : vector<1x128xi32> to vector<1x128xf32>
    %c1_i32_18 = arith.constant 1 : i32
    %71 = vector.broadcast %c1_i32_18 : i32 to vector<1x3xi32>
    %72 = arith.cmpi eq, %28, %71 : vector<1x3xi32>
    %73 = vector.broadcast %70 : vector<1x128xf32> to vector<4x128xf32>
    %74 = arith.mulf %15, %73 : vector<4x128xf32>
    %cst_19 = arith.constant dense<0.000000e+00> : vector<4xf32>
    %75 = vector.multi_reduction <add>, %74, %cst_19 [1] : vector<4x128xf32> to vector<4xf32>
    %76 = vector.shape_cast %75 : vector<4xf32> to vector<4x1xf32>
    %cst_20 = arith.constant 0.000000e+00 : f32
    %77 = vector.shape_cast %72 : vector<1x3xi1> to vector<1x3xi1>
    %78 = vector.broadcast %77 : vector<1x3xi1> to vector<4x3xi1>
    %79 = vector.shape_cast %76 : vector<4x1xf32> to vector<4x1xf32>
    %80 = vector.broadcast %79 : vector<4x1xf32> to vector<4x3xf32>
    %81 = vector.broadcast %cst_20 : f32 to vector<4x3xf32>
    %82 = arith.select %78, %80, %81 : vector<4x3xi1>, vector<4x3xf32>
    %83 = arith.addf %48, %82 : vector<4x3xf32>
    %84 = vector.broadcast %70 : vector<1x128xf32> to vector<4x128xf32>
    %85 = arith.mulf %27, %84 : vector<4x128xf32>
    %cst_21 = arith.constant dense<0.000000e+00> : vector<4xf32>
    %86 = vector.multi_reduction <add>, %85, %cst_21 [1] : vector<4x128xf32> to vector<4xf32>
    %87 = vector.shape_cast %86 : vector<4xf32> to vector<4x1xf32>
    %cst_22 = arith.constant 0.000000e+00 : f32
    %88 = vector.shape_cast %72 : vector<1x3xi1> to vector<1x3xi1>
    %89 = vector.broadcast %88 : vector<1x3xi1> to vector<4x3xi1>
    %90 = vector.shape_cast %87 : vector<4x1xf32> to vector<4x1xf32>
    %91 = vector.broadcast %90 : vector<4x1xf32> to vector<4x3xf32>
    %92 = vector.broadcast %cst_22 : f32 to vector<4x3xf32>
    %93 = arith.select %89, %91, %92 : vector<4x3xi1>, vector<4x3xf32>
    %94 = arith.addf %59, %93 : vector<4x3xf32>
    %cst_23 = arith.constant dense<0.000000e+00> : vector<1xf32>
    %95 = vector.multi_reduction <add>, %70, %cst_23 [1] : vector<1x128xf32> to vector<1xf32>
    %96 = vector.shape_cast %95 : vector<1xf32> to vector<1x1xf32>
    %cst_24 = arith.constant 0.000000e+00 : f32
    %97 = vector.shape_cast %96 : vector<1x1xf32> to vector<1x1xf32>
    %98 = vector.broadcast %97 : vector<1x1xf32> to vector<1x3xf32>
    %99 = vector.broadcast %cst_24 : f32 to vector<1x3xf32>
    %100 = arith.select %72, %98, %99 : vector<1x3xi1>, vector<1x3xf32>
    %101 = arith.addf %66, %100 : vector<1x3xf32>
    %c2_i32 = arith.constant 2 : i32
    %102 = vector.broadcast %c2_i32 : i32 to vector<1x128xi32>
    %103 = arith.cmpi eq, %4, %102 : vector<1x128xi32>
    %104 = arith.extui %103 : vector<1x128xi1> to vector<1x128xi32>
    %105 = arith.sitofp %104 : vector<1x128xi32> to vector<1x128xf32>
    %c2_i32_25 = arith.constant 2 : i32
    %106 = vector.broadcast %c2_i32_25 : i32 to vector<1x3xi32>
    %107 = arith.cmpi eq, %28, %106 : vector<1x3xi32>
    %108 = vector.broadcast %105 : vector<1x128xf32> to vector<4x128xf32>
    %109 = arith.mulf %15, %108 : vector<4x128xf32>
    %cst_26 = arith.constant dense<0.000000e+00> : vector<4xf32>
    %110 = vector.multi_reduction <add>, %109, %cst_26 [1] : vector<4x128xf32> to vector<4xf32>
    %111 = vector.shape_cast %110 : vector<4xf32> to vector<4x1xf32>
    %cst_27 = arith.constant 0.000000e+00 : f32
    %112 = vector.shape_cast %107 : vector<1x3xi1> to vector<1x3xi1>
    %113 = vector.broadcast %112 : vector<1x3xi1> to vector<4x3xi1>
    %114 = vector.shape_cast %111 : vector<4x1xf32> to vector<4x1xf32>
    %115 = vector.broadcast %114 : vector<4x1xf32> to vector<4x3xf32>
    %116 = vector.broadcast %cst_27 : f32 to vector<4x3xf32>
    %117 = arith.select %113, %115, %116 : vector<4x3xi1>, vector<4x3xf32>
    %118 = arith.addf %83, %117 : vector<4x3xf32>
    %119 = vector.broadcast %105 : vector<1x128xf32> to vector<4x128xf32>
    %120 = arith.mulf %27, %119 : vector<4x128xf32>
    %cst_28 = arith.constant dense<0.000000e+00> : vector<4xf32>
    %121 = vector.multi_reduction <add>, %120, %cst_28 [1] : vector<4x128xf32> to vector<4xf32>
    %122 = vector.shape_cast %121 : vector<4xf32> to vector<4x1xf32>
    %cst_29 = arith.constant 0.000000e+00 : f32
    %123 = vector.shape_cast %107 : vector<1x3xi1> to vector<1x3xi1>
    %124 = vector.broadcast %123 : vector<1x3xi1> to vector<4x3xi1>
    %125 = vector.shape_cast %122 : vector<4x1xf32> to vector<4x1xf32>
    %126 = vector.broadcast %125 : vector<4x1xf32> to vector<4x3xf32>
    %127 = vector.broadcast %cst_29 : f32 to vector<4x3xf32>
    %128 = arith.select %124, %126, %127 : vector<4x3xi1>, vector<4x3xf32>
    %129 = arith.addf %94, %128 : vector<4x3xf32>
    %cst_30 = arith.constant dense<0.000000e+00> : vector<1xf32>
    %130 = vector.multi_reduction <add>, %105, %cst_30 [1] : vector<1x128xf32> to vector<1xf32>
    %131 = vector.shape_cast %130 : vector<1xf32> to vector<1x1xf32>
    %cst_31 = arith.constant 0.000000e+00 : f32
    %132 = vector.shape_cast %131 : vector<1x1xf32> to vector<1x1xf32>
    %133 = vector.broadcast %132 : vector<1x1xf32> to vector<1x3xf32>
    %134 = vector.broadcast %cst_31 : f32 to vector<1x3xf32>
    %135 = arith.select %107, %133, %134 : vector<1x3xi1>, vector<1x3xf32>
    %136 = arith.addf %101, %135 : vector<1x3xf32>
    %c0_32 = arith.constant 0 : index
    %c0_33 = arith.constant 0 : index
    %137 = vector.load %arg6[%c0_32, %c0_33] : memref<4x3xf32, #tpu.memory_space<vmem>>, vector<4x3xf32>
    %138 = arith.addf %137, %118 : vector<4x3xf32>
    %c0_34 = arith.constant 0 : index
    %c0_35 = arith.constant 0 : index
    %139 = vector.load %arg6[%c0_34, %c0_35] : memref<4x3xf32, #tpu.memory_space<vmem>>, vector<4x3xf32>
    tpu.vector_store %arg6[%c0_34, %c0_35], %138 {strides = array<i32>} : memref<4x3xf32, #tpu.memory_space<vmem>>, vector<4x3xf32>,
    %c0_36 = arith.constant 0 : index
    %c0_37 = arith.constant 0 : index
    %140 = vector.load %arg7[%c0_36, %c0_37] : memref<4x3xf32, #tpu.memory_space<vmem>>, vector<4x3xf32>
    %141 = arith.addf %140, %129 : vector<4x3xf32>
    %c0_38 = arith.constant 0 : index
    %c0_39 = arith.constant 0 : index
    %142 = vector.load %arg7[%c0_38, %c0_39] : memref<4x3xf32, #tpu.memory_space<vmem>>, vector<4x3xf32>
    tpu.vector_store %arg7[%c0_38, %c0_39], %141 {strides = array<i32>} : memref<4x3xf32, #tpu.memory_space<vmem>>, vector<4x3xf32>,
    %c0_40 = arith.constant 0 : index
    %c0_41 = arith.constant 0 : index
    %143 = vector.load %arg8[%c0_40, %c0_41] : memref<1x3xf32, #tpu.memory_space<vmem>>, vector<1x3xf32>
    %144 = arith.addf %143, %136 : vector<1x3xf32>
    %c0_42 = arith.constant 0 : index
    %c0_43 = arith.constant 0 : index
    %145 = vector.load %arg8[%c0_42, %c0_43] : memref<1x3xf32, #tpu.memory_space<vmem>>, vector<1x3xf32>
    tpu.vector_store %arg8[%c0_42, %c0_43], %144 {strides = array<i32>} : memref<1x3xf32, #tpu.memory_space<vmem>>, vector<1x3xf32>,
    %c3_i32 = arith.constant 3 : i32
    %146 = arith.cmpi eq, %arg0, %c3_i32 : i32
    %147 = arith.extui %146 : i1 to i32
    %c0_i32_44 = arith.constant 0 : i32
    %148 = arith.cmpi ne, %147, %c0_i32_44 : i32
    scf.if %148 {
      %c0_45 = arith.constant 0 : index
      %c0_46 = arith.constant 0 : index
      %149 = vector.load %arg3[%c0_45, %c0_46] : memref<4x3xf32, #tpu.memory_space<vmem>>, vector<4x3xf32>
      %c0_47 = arith.constant 0 : index
      %c0_48 = arith.constant 0 : index
      %150 = vector.load %arg4[%c0_47, %c0_48] : memref<4x3xf32, #tpu.memory_space<vmem>>, vector<4x3xf32>
      %c0_49 = arith.constant 0 : index
      %c0_50 = arith.constant 0 : index
      %151 = vector.load %arg8[%c0_49, %c0_50] : memref<1x3xf32, #tpu.memory_space<vmem>>, vector<1x3xf32>
      %cst_51 = arith.constant 0.000000e+00 : f32
      %152 = vector.broadcast %cst_51 : f32 to vector<1x3xf32>
      %153 = arith.cmpf ogt, %151, %152 : vector<1x3xf32>
      %cst_52 = arith.constant 1.000000e+00 : f32
      %154 = vector.broadcast %cst_52 : f32 to vector<1x3xf32>
      %155 = arith.select %153, %151, %154 : vector<1x3xi1>, vector<1x3xf32>
      %c0_53 = arith.constant 0 : index
      %c0_54 = arith.constant 0 : index
      %156 = vector.load %arg6[%c0_53, %c0_54] : memref<4x3xf32, #tpu.memory_space<vmem>>, vector<4x3xf32>
      %157 = vector.broadcast %155 : vector<1x3xf32> to vector<4x3xf32>
      %158 = arith.divf %156, %157 : vector<4x3xf32>
      %c0_55 = arith.constant 0 : index
      %c0_56 = arith.constant 0 : index
      %159 = vector.load %arg7[%c0_55, %c0_56] : memref<4x3xf32, #tpu.memory_space<vmem>>, vector<4x3xf32>
      %160 = vector.broadcast %151 : vector<1x3xf32> to vector<4x3xf32>
      %161 = arith.subf %160, %159 : vector<4x3xf32>
      %162 = vector.broadcast %155 : vector<1x3xf32> to vector<4x3xf32>
      %163 = arith.divf %161, %162 : vector<4x3xf32>
      %cst_57 = arith.constant 1.000000e+00 : f32
      %164 = vector.broadcast %cst_57 : f32 to vector<4x3xf32>
      %165 = arith.subf %164, %149 : vector<4x3xf32>
      %166 = arith.subf %158, %165 : vector<4x3xf32>
      %167 = arith.cmpf olt, %163, %165 : vector<4x3xf32>
      %cst_58 = arith.constant -1.000000e+00 : f32
      %168 = vector.broadcast %cst_58 : f32 to vector<4x3xf32>
      %169 = arith.mulf %168, %166 : vector<4x3xf32>
      %170 = arith.select %167, %169, %166 : vector<4x3xi1>, vector<4x3xf32>
      %171 = math.absf %150 : vector<4x3xf32>
      %172 = arith.mulf %170, %171 : vector<4x3xf32>
      %173 = arith.mulf %158, %150 : vector<4x3xf32>
      %cst_59 = arith.constant dense<0.000000e+00> : vector<3xf32>
      %174 = vector.multi_reduction <add>, %173, %cst_59 [0] : vector<4x3xf32> to vector<3xf32>
      %175 = vector.shape_cast %174 : vector<3xf32> to vector<1x3xf32>
      %cst_60 = arith.constant 0.699999988 : f32
      %176 = vector.broadcast %cst_60 : f32 to vector<1x3xf32>
      %177 = arith.mulf %176, %175 : vector<1x3xf32>
      %cst_61 = arith.constant dense<0.000000e+00> : vector<3xf32>
      %178 = vector.multi_reduction <add>, %172, %cst_61 [0] : vector<4x3xf32> to vector<3xf32>
      %179 = vector.shape_cast %178 : vector<3xf32> to vector<1x3xf32>
      %cst_62 = arith.constant 3.000000e-01 : f32
      %180 = vector.broadcast %cst_62 : f32 to vector<1x3xf32>
      %181 = arith.mulf %180, %179 : vector<1x3xf32>
      %182 = arith.addf %177, %181 : vector<1x3xf32>
      %cst_63 = arith.constant 1.000000e+00 : f32
      %183 = vector.broadcast %cst_63 : f32 to vector<1x3xf32>
      %184 = arith.select %153, %182, %183 : vector<1x3xi1>, vector<1x3xf32>
      %185 = vector.shape_cast %184 : vector<1x3xf32> to vector<1x1x3xf32>
      %cst_64 = arith.constant dense<0.000000e+00> : vector<1xf32>
      %186 = vector.multi_reduction <add>, %185, %cst_64 [1, 2] : vector<1x1x3xf32> to vector<1xf32>
      %187 = vector.shape_cast %186 : vector<1xf32> to vector<1x1x1xf32>
      %188 = vector.extract %187[0, 0, 0] : f32 from vector<1x1x1xf32>
      %189 = vector.broadcast %188 : f32 to vector<1x1xf32>
      %c0_65 = arith.constant 0 : index
      %c0_66 = arith.constant 0 : index
      %190 = vector.load %arg5[%c0_65, %c0_66] : memref<1x1xf32, #tpu.memory_space<vmem>>, vector<1x1xf32>
      tpu.vector_store %arg5[%c0_65, %c0_66], %189 {strides = array<i32>} : memref<1x1xf32, #tpu.memory_space<vmem>>, vector<1x1xf32>,
    } else {
    }
    return
  }
  func.func @transform_0(%arg0: i32) -> (i32, i32) {
    %c0_i32 = arith.constant 0 : i32
    %c0_i32_0 = arith.constant 0 : i32
    return %c0_i32, %arg0 : i32, i32
  }
  func.func @transform_1(%arg0: i32) -> (i32, i32) {
    %c0_i32 = arith.constant 0 : i32
    %c0_i32_0 = arith.constant 0 : i32
    return %c0_i32, %arg0 : i32, i32
  }
  func.func @transform_2(%arg0: i32) -> (i32, i32) {
    %c0_i32 = arith.constant 0 : i32
    %c0_i32_0 = arith.constant 0 : i32
    %c0_i32_1 = arith.constant 0 : i32
    return %c0_i32, %c0_i32_0 : i32, i32
  }
  func.func @transform_3(%arg0: i32) -> (i32, i32) {
    %c0_i32 = arith.constant 0 : i32
    %c0_i32_0 = arith.constant 0 : i32
    %c0_i32_1 = arith.constant 0 : i32
    return %c0_i32, %c0_i32_0 : i32, i32
  }
  func.func @transform_4(%arg0: i32) -> (i32, i32) {
    %c0_i32 = arith.constant 0 : i32
    %c0_i32_0 = arith.constant 0 : i32
    %c0_i32_1 = arith.constant 0 : i32
    return %c0_i32, %c0_i32_0 : i32, i32
  }
}

</mosaic_0001>

<llo_original>
// kernel: tpu_custom_call.1
$region0: #{tpu_custom_call.1}
  #allocation0 [shape = 'u32[]', space=smem, size = 0x4, offset = 0x4, fixed_abs, tag = 'smem constant byte address 0x4 - core index']
  #allocation1 [shape = 'u32[144,128]{1,0:T(1,128)}', space=vmem, size = 0x12000, scoped, tag = 'internal scratch']
  #allocation2 [shape = 'f32[4,3]{1,0:T(4,128)}', space=vmem, size = 0x800, scoped, tag = 'scratch operand']
  #allocation3 [shape = 'f32[4,3]{1,0:T(4,128)}', space=vmem, size = 0x800, scoped, tag = 'scratch operand']
  #allocation4 [shape = 'f32[1,3]{1,0:T(1,128)}', space=vmem, size = 0x200, scoped, tag = 'scratch operand']
  %s0 = inlined_call_operand.hbm [shape: f32[4,512], index: 0, kind: input, shape index: {}]
  %s1 = inlined_call_operand.hbm [shape: s32[1,512], index: 1, kind: input, shape index: {}]
  %s2 = inlined_call_operand.vmem [shape: f32[4,3], index: 2, kind: input, shape index: {}]
  %s3 = inlined_call_operand.vmem [shape: f32[4,3], index: 3, kind: input, shape index: {}]
  %s4 = inlined_call_operand.hbm [shape: f32[1,1], index: 4, kind: output, shape index: {}]
  %s5 = sld [smem:[#allocation0]]
  $region65: #{tpu_custom_call.1} parent=0
    _
  %s7 = ssub.s32 1, %s5
  %s8 = scalar_select 0, %s7, %s5
  $region1: #{tpu_custom_call.1} parent=0
    #allocation5 [shape = 'u8[4096]{0}', space=vmem, size = 0x1000, scoped, tag = 'input window, operand 0']
    #allocation6 [shape = 's32[2]{0}', space=sflag, size = 0x8, scoped, tag = 'scoped memory for tpu_custom_call.1']
    #allocation7 [shape = 's32[2]{0}', space=sflag, size = 0x8, scoped, tag = 'scoped memory for tpu_custom_call.1']
    #allocation8 [shape = 'u8[1024]{0}', space=vmem, size = 0x400, scoped, tag = 'input window, operand 1']
    #allocation9 [shape = 's32[2]{0}', space=sflag, size = 0x8, scoped, tag = 'scoped memory for tpu_custom_call.1']
    #allocation10 [shape = 'u8[512]{0}', space=vmem, size = 0x400, scoped, tag = 'output window, operand 0, single buffered']
    %9 = vsyncpa [#allocation6], 0
    %s10 = scalar_lea.sflag [#allocation6], 1
    %11 = vsyncpa %s10, 0
    %12 = vsyncpa [#allocation9], 0
    %s13 = scalar_lea.sflag [#allocation9], 1
    %14 = vsyncpa %s13, 0
    %15 = vsyncpa [#allocation7], 0
    loop: start=0, step=1, limit=6
    $region2: #{tpu_custom_call.1} parent=1 // loop_pre_header
      _
    $region3: #{tpu_custom_call.1} parent=1 // loop_header
      %s17 = sphi 0, %s21
      %p18 = scmp.ge.s32.totalorder %s17, 6
      %s27 = sphi 0, %s29
      %s30 = sphi 0, %s27
      %s31 = sphi 0, %s30
      %s47 = sphi 0, %s31
      %s53 = sphi 0, %s55
      %s56 = sphi 0, %s53
      %s57 = sphi 0, %s56
      %s73 = sphi 0, %s57
      %s77 = sphi 0, %s77
      %s79 = sphi 0, %s77
      %s80 = sphi 0, %s79
      %s94 = sphi 0, %s80
      %s98 = sphi 0, %s98
      %s100 = sphi 0, %s98
      %s101 = sphi 0, %s100
      %s115 = sphi 0, %s101
      %s119 = sphi 0, %s119
      %s121 = sphi 0, %s119
      %s122 = sphi 0, %s121
      %s136 = sphi 0, %s122
    $region4: #{tpu_custom_call.1} parent=1 // loop_header_branch
      %20 = sbr.rel (%p18) target = $region8
    $region5: #{tpu_custom_call.1} parent=1 // loop_body
      %s22 = ssub.s32 %s17, 1
      %s23 = ssub.s32 %s17, 2
      %s24 = sadd.s32 %s17, 1
      %s25 = ssub.s32 %s17, %s24
      %p26 = scmp.eq.s32.totalorder %s25, 0
      %s28 = sadd.s32 %s27, 1
      %s29 = scalar_select %p26, %s27, %s28
      %p32 = pneg %p26
      %p33 = scmp.eq.s32.totalorder %s17, 3
      %p34 = por %p32, %p33
      %p35 = scmp.ne.s32.totalorder %s27, %s30
      %p36 = scmp.eq.s32.totalorder %s17, 0
      %p37 = por %p35, %p36
      %p38 = scmp.ne.s32.totalorder %s27, %s30
      %p39 = scmp.eq.s32.totalorder %s22, 3
      %p40 = por %p38, %p39
      %p41 = scmp.ne.s32.totalorder %s30, %s31
      %p42 = scmp.eq.s32.totalorder %s22, 0
      %p43 = por %p41, %p42
      %p44 = scmp.ne.s32.totalorder %s30, %s31
      %p45 = scmp.eq.s32.totalorder %s23, 3
      %p46 = por %p44, %p45
      %p48 = scmp.ne.s32.totalorder %s31, %s47
      %p49 = scmp.eq.s32.totalorder %s23, 0
      %p50 = por %p48, %p49
      %s51 = ssub.s32 %s17, %s24
      %p52 = scmp.eq.s32.totalorder %s51, 0
      %s54 = sadd.s32 %s53, 1
      %s55 = scalar_select %p52, %s53, %s54
      %p58 = pneg %p52
      %p59 = scmp.eq.s32.totalorder %s17, 3
      %p60 = por %p58, %p59
      %p61 = scmp.ne.s32.totalorder %s53, %s56
      %p62 = scmp.eq.s32.totalorder %s17, 0
      %p63 = por %p61, %p62
      %p64 = scmp.ne.s32.totalorder %s53, %s56
      %p65 = scmp.eq.s32.totalorder %s22, 3
      %p66 = por %p64, %p65
      %p67 = scmp.ne.s32.totalorder %s56, %s57
      %p68 = scmp.eq.s32.totalorder %s22, 0
      %p69 = por %p67, %p68
      %p70 = scmp.ne.s32.totalorder %s56, %s57
      %p71 = scmp.eq.s32.totalorder %s23, 3
      %p72 = por %p70, %p71
      %p74 = scmp.ne.s32.totalorder %s57, %s73
      %p75 = scmp.eq.s32.totalorder %s23, 0
      %p76 = por %p74, %p75
      %s78 = sadd.s32 %s77, 1
      %p81 = scmp.eq.s32.totalorder %s17, 3
      %p82 = scmp.ne.s32.totalorder %s77, %s79
      %p83 = scmp.eq.s32.totalorder %s17, 0
      %p84 = por %p82, %p83
      %p85 = scmp.ne.s32.totalorder %s77, %s79
      %p86 = scmp.eq.s32.totalorder %s22, 3
      %p87 = por %p85, %p86
      %p88 = scmp.ne.s32.totalorder %s79, %s80
      %p89 = scmp.eq.s32.totalorder %s22, 0
      %p90 = por %p88, %p89
      %p91 = scmp.ne.s32.totalorder %s79, %s80
      %p92 = scmp.eq.s32.totalorder %s23, 3
      %p93 = por %p91, %p92
      %p95 = scmp.ne.s32.totalorder %s80, %s94
      %p96 = scmp.eq.s32.totalorder %s23, 0
      %p97 = por %p95, %p96
      %s99 = sadd.s32 %s98, 1
      %p102 = scmp.eq.s32.totalorder %s17, 3
      %p103 = scmp.ne.s32.totalorder %s98, %s100
      %p104 = scmp.eq.s32.totalorder %s17, 0
      %p105 = por %p103, %p104
      %p106 = scmp.ne.s32.totalorder %s98, %s100
      %p107 = scmp.eq.s32.totalorder %s22, 3
      %p108 = por %p106, %p107
      %p109 = scmp.ne.s32.totalorder %s100, %s101
      %p110 = scmp.eq.s32.totalorder %s22, 0
      %p111 = por %p109, %p110
      %p112 = scmp.ne.s32.totalorder %s100, %s101
      %p113 = scmp.eq.s32.totalorder %s23, 3
      %p114 = por %p112, %p113
      %p116 = scmp.ne.s32.totalorder %s101, %s115
      %p117 = scmp.eq.s32.totalorder %s23, 0
      %p118 = por %p116, %p117
      %s120 = sadd.s32 %s119, 1
      %p123 = scmp.eq.s32.totalorder %s17, 3
      %p124 = scmp.ne.s32.totalorder %s119, %s121
      %p125 = scmp.eq.s32.totalorder %s17, 0
      %p126 = por %p124, %p125
      %p127 = scmp.ne.s32.totalorder %s119, %s121
      %p128 = scmp.eq.s32.totalorder %s22, 3
      %p129 = por %p127, %p128
      %p130 = scmp.ne.s32.totalorder %s121, %s122
      %p131 = scmp.eq.s32.totalorder %s22, 0
      %p132 = por %p130, %p131
      %p133 = scmp.ne.s32.totalorder %s121, %s122
      %p134 = scmp.eq.s32.totalorder %s23, 3
      %p135 = por %p133, %p134
      %p137 = scmp.ne.s32.totalorder %s122, %s136
      %p138 = scmp.eq.s32.totalorder %s23, 0
      %p139 = por %p137, %p138
      %p140 = scmp.le.s32.totalorder 1, %s17
      %p141 = scmp.lt.s32.totalorder %s17, 5
      %p142 = pnand %p140, %p141
      %p143 = pneg %p142
      // Predicated region
      $region9: #{tpu_custom_call.1} parent=5 // pred_check
        _
      $region10: #{tpu_custom_call.1} parent=5 // pred_check_branch
        %145 = sbr.rel (%p142) target = $region12
      $region11: #{tpu_custom_call.1} parent=5 // pred_region
        %s146 = ssub.s32 %s17, 1
        // Predicated region
        $region13: #{tpu_custom_call.1} parent=11 // pred_check
          %p147 = pneg %p90
        $region14: #{tpu_custom_call.1} parent=11 // pred_check_branch
          %149 = sbr.rel (%p147) target = $region16
        $region15: #{tpu_custom_call.1} parent=11 // pred_region
          _
        $region16: #{tpu_custom_call.1} parent=11 // pred_fallthru
          _
        // Predicated region
        $region17: #{tpu_custom_call.1} parent=11 // pred_check
          %p150 = pneg %p111
        $region18: #{tpu_custom_call.1} parent=11 // pred_check_branch
          %152 = sbr.rel (%p150) target = $region20
        $region19: #{tpu_custom_call.1} parent=11 // pred_region
          _
        $region20: #{tpu_custom_call.1} parent=11 // pred_fallthru
          _
      $region12: #{tpu_custom_call.1} parent=5 // pred_fallthru
        _
      %p153 = scmp.lt.s32.totalorder %s17, 4
      // Predicated region
      $region21: #{tpu_custom_call.1} parent=5 // pred_check
        %p154 = pneg %p153
      $region22: #{tpu_custom_call.1} parent=5 // pred_check_branch
        %156 = sbr.rel (%p154) target = $region24
      $region23: #{tpu_custom_call.1} parent=5 // pred_region
        // Predicated region
        $region25: #{tpu_custom_call.1} parent=23 // pred_check
          %p157 = pneg %p37
        $region26: #{tpu_custom_call.1} parent=23 // pred_check_branch
          %159 = sbr.rel (%p157) target = $region28
        $region27: #{tpu_custom_call.1} parent=23 // pred_region
          %s160 = sand.u32 %s27, 1
          %s161 = scalar_lea.sflag [#allocation6], %s160
          %s162 = sand.u32 %s27, 1
          %s163 = smul.addr %s162, 4
          %s164 = scalar_lea.vmem [#allocation5], %s163
          %s166 = ssub.s32 64, 64
          %167 = vsyncadd %s161, %s166
          %s168 = smul.addr %s17, 64
          %s169 = scalar_lea.hbm %s0, %s168
          %s171 = sshll.u32 %s164, 4
          %s172 = int_to_ptr.vmem [resolvable:$true] %s171
          %174 = dma.hbm_to_vmem [thread:$0]  %s169, 64, %s172, %s161
        $region28: #{tpu_custom_call.1} parent=23 // pred_fallthru
          _
        // Predicated region
        $region29: #{tpu_custom_call.1} parent=23 // pred_check
          %p175 = pneg %p63
        $region30: #{tpu_custom_call.1} parent=23 // pred_check_branch
          %177 = sbr.rel (%p175) target = $region32
        $region31: #{tpu_custom_call.1} parent=23 // pred_region
          %s178 = sand.u32 %s53, 1
          %s179 = scalar_lea.sflag [#allocation9], %s178
          %s180 = sand.u32 %s53, 1
          %s181 = scalar_lea.vmem [#allocation8], %s180
          %s183 = ssub.s32 16, 16
          %184 = vsyncadd %s179, %s183
          %s185 = smul.addr %s17, 16
          %s186 = scalar_lea.hbm %s1, %s185
          %s188 = sshll.u32 %s181, 4
          %s189 = int_to_ptr.vmem [resolvable:$true] %s188
          %191 = dma.hbm_to_vmem [thread:$0]  %s186, 16, %s189, %s179
        $region32: #{tpu_custom_call.1} parent=23 // pred_fallthru
          _
      $region24: #{tpu_custom_call.1} parent=5 // pred_fallthru
        _
      %p192 = scmp.le.s32.totalorder 1, %s17
      %p193 = scmp.lt.s32.totalorder %s17, 5
      %p194 = pnand %p192, %p193
      %p195 = pneg %p194
      // Predicated region
      $region33: #{tpu_custom_call.1} parent=5 // pred_check
        _
      $region34: #{tpu_custom_call.1} parent=5 // pred_check_branch
        %197 = sbr.rel (%p194) target = $region36
      $region35: #{tpu_custom_call.1} parent=5 // pred_region
        %s198 = ssub.s32 %s17, 1
        %s199 = sand.u32 %s30, 1
        %s200 = scalar_lea.sflag [#allocation6], %s199
        %s201 = sand.u32 %s30, 1
        %s202 = smul.addr %s201, 4
        %s203 = scalar_lea.vmem [#allocation5], %s202
        // Predicated region
        $region37: #{tpu_custom_call.1} parent=35 // pred_check
          %p204 = pneg %p43
        $region38: #{tpu_custom_call.1} parent=35 // pred_check_branch
          %206 = sbr.rel (%p204) target = $region40
        $region39: #{tpu_custom_call.1} parent=35 // pred_region
          %207 = dma.done %s200, 64
        $region40: #{tpu_custom_call.1} parent=35 // pred_fallthru
          _
        %s208 = sand.u32 %s56, 1
        %s209 = scalar_lea.sflag [#allocation9], %s208
        %s210 = sand.u32 %s56, 1
        %s211 = scalar_lea.vmem [#allocation8], %s210
        // Predicated region
        $region41: #{tpu_custom_call.1} parent=35 // pred_check
          %p212 = pneg %p69
        $region42: #{tpu_custom_call.1} parent=35 // pred_check_branch
          %214 = sbr.rel (%p212) target = $region44
        $region43: #{tpu_custom_call.1} parent=35 // pred_region
          %215 = dma.done %s209, 16
        $region44: #{tpu_custom_call.1} parent=35 // pred_fallthru
          _
        %s216 = sand.u32 %s30, 1
        %s217 = scalar_lea.sflag [#allocation6], %s216
        %s218 = sand.u32 %s30, 1
        %s219 = smul.addr %s218, 4
        %s220 = scalar_lea.vmem [#allocation5], %s219
        %p221 = pneg %p43
        %p222 = pneg %p40
        %s223 = sand.u32 %s56, 1
        %s224 = scalar_lea.sflag [#allocation9], %s223
        %s225 = sand.u32 %s56, 1
        %s226 = scalar_lea.vmem [#allocation8], %s225
        %p227 = pneg %p69
        %p228 = pneg %p66
        %p229 = pneg %p90
        %p230 = pneg %p87
        %p231 = pneg %p111
        %p232 = pneg %p108
        %p233 = pneg %p132
        %p234 = pneg %p129
        %p235 = scmp.eq.s32.totalorder %s22, 0
        // Predicated region
        $region45: #{tpu_custom_call.1} parent=35 // pred_check
          %p236 = pneg %p235
        $region46: #{tpu_custom_call.1} parent=35 // pred_check_branch
          %238 = sbr.rel (%p236) target = $region48
        $region47: #{tpu_custom_call.1} parent=35 // pred_region
          %vm239 = vcmask 19456
          %240 = vst.msk [vmem:[#allocation2] sm:$0xf] %vm239, 0.0
          %241 = vst.msk [vmem:[#allocation3] sm:$0xf] %vm239, 0.0
          %vm242 = vcmask 16384
          %243 = vst.msk [vmem:[#allocation4] sm:$0x1] %vm242, 0.0
        $region48: #{tpu_custom_call.1} parent=35 // pred_fallthru
          _
        %v244 = vld [vmem:[%s203] sm:$0xf]
        %v245 = vld [vmem:[%s211] sm:$0x1]
        %vm246 = vcmask 1043456
        %v247 = vsel %vm246, %v244, -inf
        %v248 = vrot.slane %v247, 4
        %v249 = vmax.f32 %v247, %v248
        %v250 = vrot.slane %v249, 2
        %v251 = vmax.f32 %v249, %v250
        %v252 = vrot.slane %v251, 1
        %v253 = vmax.f32 %v251, %v252
        %v254 = vsub.f32 %v244, %v253
        %v255 = vmul.f32 %v254, 1.442695
        %v256 = vpow.pop %v255
        %v257 = vsel %vm246, %v256, 0.0
        %v258 = vrot.slane %v257, 4
        %v259 = vadd.f32 %v257, %v258
        %v260 = vrot.slane %v259, 2
        %v261 = vadd.f32 %v259, %v260
        %v262 = vrot.slane %v261, 1
        %v263 = vadd.f32 %v261, %v262
        %v264 = vlog2.pop %v263
        %v265 = vmul.f32 %v264, 0.6931472
        %v266 = vadd.f32 %v253, %v265
        %v267 = vsub.f32 %v266, %v244
        %v268 = vlaneseq
        %v269 = vshrl.u32 %v268, 7
        %v270 = vcvt.s32.f32 %v269
        %vm271 = vcmp.eq.f32.partialorder %v244, %v253
        %v272 = vsel %vm271, %v270, 4.0
        %v273 = vsel %vm246, %v272, inf
        %v274 = vrot.slane %v273, 4
        %v275 = vmin.f32 %v273, %v274
        %v276 = vrot.slane %v275, 2
        %v277 = vmin.f32 %v275, %v276
        %v278 = vrot.slane %v277, 1
        %v279 = vmin.f32 %v277, %v278
        %vm280 = vcmp.eq.f32.partialorder %v270, %v279
        %v281 = vsel %vm280, 1, 0
        %v282 = vcvt.s32.f32 %v281
        %v283 = vlaneseq
        %v284 = vand.u32 %v283, 127
        %vm285 = vcmp.eq.s32.totalorder %v245, 0
        %v286 = vsel %vm285, 1, 0
        %v287 = vcvt.s32.f32 %v286
        %vm288 = vcmp.eq.s32.totalorder %v284, 0
        %v290 = vlaneseq
        %v291 = vshrl.u32 %v290, 7
        %v292 = vsub.s32 0, %v291
        %v293 = vrot.slane %v287, %v292
        %v295 = vmul.f32 %v267, %v293
        %v296 = vsel %vm246, %v295, 0.0
        %297 = vadd.xlane.f32.xlu0 %v296
        %v298 = vpop.xlane.xlu0 %297
        %v299 = vsel %vm288, 1, 0
        %vm300 = vcmp.eq.s32.totalorder %v299, 1
        %v301 = vsel %vm300, %v298, 0.0
        %v302 = vadd.f32 %v301, 0.0
        %v303 = vmul.f32 %v282, %v293
        %v304 = vsel %vm246, %v303, 0.0
        %305 = vadd.xlane.f32.xlu0 %v304
        %v306 = vpop.xlane.xlu0 %305
        %v307 = vsel %vm300, %v306, 0.0
        %v308 = vadd.f32 %v307, 0.0
        %vm309 = vcmask 1040384
        %v310 = vsel %vm309, %v287, 0.0
        %311 = vadd.xlane.f32.xlu0 %v310
        %v312 = vpop.xlane.xlu0 %311
        %v313 = vsel %vm288, %v312, 0.0
        %v314 = vadd.f32 %v313, 0.0
        %vm315 = vcmp.eq.s32.totalorder %v245, 1
        %v316 = vsel %vm315, 1, 0
        %v317 = vcvt.s32.f32 %v316
        %vm318 = vcmp.eq.s32.totalorder %v284, 1
        %v320 = vlaneseq
        %v321 = vshrl.u32 %v320, 7
        %v322 = vsub.s32 0, %v321
        %v323 = vrot.slane %v317, %v322
        %v325 = vmul.f32 %v267, %v323
        %v326 = vsel %vm246, %v325, 0.0
        %327 = vadd.xlane.f32.xlu0 %v326
        %v328 = vpop.xlane.xlu0 %327
        %v329 = vsel %vm318, 1, 0
        %vm330 = vcmp.eq.s32.totalorder %v329, 1
        %v331 = vsel %vm330, %v328, 0.0
        %v332 = vadd.f32 %v302, %v331
        %v333 = vmul.f32 %v282, %v323
        %v334 = vsel %vm246, %v333, 0.0
        %335 = vadd.xlane.f32.xlu0 %v334
        %v336 = vpop.xlane.xlu0 %335
        %v337 = vsel %vm330, %v336, 0.0
        %v338 = vadd.f32 %v308, %v337
        %v339 = vsel %vm309, %v317, 0.0
        %340 = vadd.xlane.f32.xlu0 %v339
        %v341 = vpop.xlane.xlu0 %340
        %v342 = vsel %vm318, %v341, 0.0
        %v343 = vadd.f32 %v314, %v342
        %vm344 = vcmp.eq.s32.totalorder %v245, 2
        %v345 = vsel %vm344, 1, 0
        %v346 = vcvt.s32.f32 %v345
        %vm347 = vcmp.eq.s32.totalorder %v284, 2
        %v349 = vlaneseq
        %v350 = vshrl.u32 %v349, 7
        %v351 = vsub.s32 0, %v350
        %v352 = vrot.slane %v346, %v351
        %v354 = vmul.f32 %v267, %v352
        %v355 = vsel %vm246, %v354, 0.0
        %356 = vadd.xlane.f32.xlu0 %v355
        %v357 = vpop.xlane.xlu0 %356
        %v358 = vsel %vm347, 1, 0
        %vm359 = vcmp.eq.s32.totalorder %v358, 1
        %v360 = vsel %vm359, %v357, 0.0
        %v361 = vadd.f32 %v332, %v360
        %v362 = vmul.f32 %v282, %v352
        %v363 = vsel %vm246, %v362, 0.0
        %364 = vadd.xlane.f32.xlu0 %v363
        %v365 = vpop.xlane.xlu0 %364
        %v366 = vsel %vm359, %v365, 0.0
        %v367 = vadd.f32 %v338, %v366
        %v368 = vsel %vm309, %v346, 0.0
        %369 = vadd.xlane.f32.xlu0 %v368
        %v370 = vpop.xlane.xlu0 %369
        %v371 = vsel %vm347, %v370, 0.0
        %v372 = vadd.f32 %v343, %v371
        %v373 = vld [vmem:[#allocation2] sm:$0xf]
        %v374 = vadd.f32 %v373, %v361
        %vm375 = vcmask 19456
        %376 = vst.msk [vmem:[#allocation2] sm:$0xf] %vm375, %v374
        %v377 = vld [vmem:[#allocation3] sm:$0xf]
        %v378 = vadd.f32 %v377, %v367
        %379 = vst.msk [vmem:[#allocation3] sm:$0xf] %vm375, %v378
        %v380 = vld [vmem:[#allocation4] sm:$0x1]
        %v381 = vadd.f32 %v380, %v372
        %vm382 = vcmask 16384
        %383 = vst.msk [vmem:[#allocation4] sm:$0x1] %vm382, %v381
        %p384 = scmp.eq.s32.totalorder %s22, 3
        // Predicated region
        $region49: #{tpu_custom_call.1} parent=35 // pred_check
          %p385 = pneg %p384
        $region50: #{tpu_custom_call.1} parent=35 // pred_check_branch
          %387 = sbr.rel (%p385) target = $region52
        $region51: #{tpu_custom_call.1} parent=35 // pred_region
          %v388 = vld [vmem:[%s2] sm:$0xf]
          %v389 = vld [vmem:[%s3] sm:$0xf]
          %v390 = vld [vmem:[#allocation4] sm:$0x1]
          %vm391 = vcmp.gt.f32.partialorder %v390, 0.0
          %v392 = vsel %vm391, %v390, 1.0
          %v393 = vld [vmem:[#allocation2] sm:$0xf]
          %v395 = vlaneseq
          %v396 = vshrl.u32 %v395, 7
          %v397 = vsub.s32 0, %v396
          %v398 = vrot.slane %v392, %v397
          %v400 = vrcp.pop %v398
          %v401 = vmul.f32 %v393, %v400
          %v402 = vld [vmem:[#allocation3] sm:$0xf]
          %v404 = vlaneseq
          %v405 = vshrl.u32 %v404, 7
          %v406 = vsub.s32 0, %v405
          %v407 = vrot.slane %v390, %v406
          %v409 = vsub.f32 %v407, %v402
          %v410 = vmul.f32 %v409, %v400
          %v411 = vsub.f32 1.0, %v388
          %v412 = vsub.f32 %v401, %v411
          %vm413 = vcmp.lt.f32.partialorder %v410, %v411
          %v414 = vmul.f32 %v412, -1.0
          %v415 = vsel %vm413, %v414, %v412
          %v416 = vand.u32 2147483647, %v389
          %v417 = vmul.f32 %v415, %v416
          %v418 = vmul.f32 %v401, %v389
          %v419 = vsel %vm375, %v418, 0.0
          %v420 = vrot.slane %v419, 4
          %v421 = vadd.f32 %v419, %v420
          %v422 = vrot.slane %v421, 2
          %v423 = vadd.f32 %v421, %v422
          %v424 = vrot.slane %v423, 1
          %v425 = vadd.f32 %v423, %v424
          %v426 = vmul.f32 %v425, 0.7
          %v427 = vsel %vm375, %v417, 0.0
          %v428 = vrot.slane %v427, 4
          %v429 = vadd.f32 %v427, %v428
          %v430 = vrot.slane %v429, 2
          %v431 = vadd.f32 %v429, %v430
          %v432 = vrot.slane %v431, 1
          %v433 = vadd.f32 %v431, %v432
          %v434 = vmul.f32 %v433, 0.3
          %v435 = vadd.f32 %v426, %v434
          %v436 = vsel %vm391, %v435, 1.0
          %v437 = vsel %vm382, %v436, 0.0
          %438 = vadd.xlane.f32.xlu0 %v437
          %v439 = vpop.xlane.xlu0 %438
          %v440 = vrot.slane %v439, 4
          %v441 = vadd.f32 %v439, %v440
          %v442 = vrot.slane %v441, 2
          %v443 = vadd.f32 %v441, %v442
          %v444 = vrot.slane %v443, 1
          %v445 = vadd.f32 %v443, %v444
          %s446 = vtos %v445
          %v447 = vstv %s446
          %vm448 = vcmask 0
          %449 = vst.msk [vmem:[#allocation10] sm:$0x1] %vm448, %v447
        $region52: #{tpu_custom_call.1} parent=35 // pred_fallthru
          _
        // Predicated region
        $region53: #{tpu_custom_call.1} parent=35 // pred_check
          %p450 = pneg %p129
        $region54: #{tpu_custom_call.1} parent=35 // pred_check_branch
          %452 = sbr.rel (%p450) target = $region56
        $region55: #{tpu_custom_call.1} parent=35 // pred_region
          %s454 = ssub.s32 16, 16
          %455 = vsyncadd [#allocation7], %s454
          %s457 = sshll.u32 [#allocation10], 4
          %s458 = int_to_ptr.vmem [resolvable:$true] %s457
          %460 = dma.vmem_to_hbm [thread:$0]  %s458, 16, %s4, [#allocation7]
        $region56: #{tpu_custom_call.1} parent=35 // pred_fallthru
          _
        // Predicated region
        $region57: #{tpu_custom_call.1} parent=35 // pred_check
          %p461 = pneg %p129
        $region58: #{tpu_custom_call.1} parent=35 // pred_check_branch
          %463 = sbr.rel (%p461) target = $region60
        $region59: #{tpu_custom_call.1} parent=35 // pred_region
          %464 = dma.done [#allocation7], 16
        $region60: #{tpu_custom_call.1} parent=35 // pred_fallthru
          _
      $region36: #{tpu_custom_call.1} parent=5 // pred_fallthru
        _
      %p465 = scmp.le.s32.totalorder 2, %s17
      // Predicated region
      $region61: #{tpu_custom_call.1} parent=5 // pred_check
        %p466 = pneg %p465
      $region62: #{tpu_custom_call.1} parent=5 // pred_check_branch
        %468 = sbr.rel (%p466) target = $region64
      $region63: #{tpu_custom_call.1} parent=5 // pred_region
        %s469 = ssub.s32 %s17, 2
      $region64: #{tpu_custom_call.1} parent=5 // pred_fallthru
        _
    $region6: #{tpu_custom_call.1} parent=1 // loop_footer
      %s21 = sadd.s32 1, %s17
    $region7: #{tpu_custom_call.1} parent=1 // loop_footer_branch
      %16 = sbr.rel target = $region3
    $region8: #{tpu_custom_call.1} parent=1 // loop_exit
      _
    %470 = vsyncpa [#allocation6], 1
    %s471 = scalar_lea.sflag [#allocation6], 1
    %472 = vsyncpa %s471, 1
    %473 = vsyncpa [#allocation9], 1
    %s474 = scalar_lea.sflag [#allocation9], 1
    %475 = vsyncpa %s474, 1
    %476 = vsyncpa [#allocation7], 1
    %s477 = scalar_lea.sflag [#allocation7], 1
    %478 = vsyncpa %s477, 1

</llo_original>
